<compile_context>
chip_gen: v7x
topology: tpu7x:2x2x1
jax: 0.10.0
libtpu: 0.0.40
codegen_flags: <defaults>
</compile_context>

<pallas_src>
import functools

import jax
import jax.numpy as jnp
from jax.experimental import pallas as pl
from jax.experimental.pallas import tpu as pltpu


def _round_up(x, m):
    return ((x + m - 1) // m) * m


# ---------------------------------------------------------------------------
# One-time hardware / feature detection (no runtime fallbacks in the forward).
# ---------------------------------------------------------------------------
def _vmem_capacity_bytes():
    try:
        return int(pltpu.get_tpu_info().vmem_capacity_bytes)
    except Exception:
        return 128 << 20  # v5e/v6e physical VMEM


_VMEM_CAP = _vmem_capacity_bytes()
_SMALL_VMEM = _VMEM_CAP <= (96 << 20)  # v7x-class: 64 MiB per TensorCore


@functools.lru_cache(maxsize=None)
def _buffered1_supported():
    """Decide pl.Buffered(1) support once (trace/compile-time probe, cached)."""
    try:
        def _probe(a_ref, o_ref):
            o_ref[...] = a_ref[...] * 2.0

        fn = pl.pallas_call(
            _probe,
            out_shape=jax.ShapeDtypeStruct((8, 128), jnp.float32),
            grid=(1,),
            in_specs=[pl.BlockSpec((8, 128), lambda i: (0, 0),
                                   pipeline_mode=pl.Buffered(1))],
            out_specs=pl.BlockSpec((8, 128), lambda i: (0, 0)),
        )
        jax.jit(fn).lower(jnp.zeros((8, 128), jnp.float32)).compile()
        return True
    except Exception:
        # TODO(synk): on v7x without Buffered(1), pass weights with
        # memory_space=pl.ANY and DMA them once into VMEM scratch via
        # pltpu.make_async_copy instead of double-buffering them.
        return False


# ---------------------------------------------------------------------------
# Fused kernel: sigmoid(relu(x @ W_enc + b_enc) @ W_dec + b_dec)
# ---------------------------------------------------------------------------
def autoencoder_kernel(x_ref, w_enc_ref, b_enc_ref, w_dec_ref, b_dec_ref, out_ref):
    # x: (tb, Dp)  w_enc: (Dp, Hp)  b_enc: (1, Hp)  w_dec: (Hp, Dp)  b_dec: (1, Dp)
    x = x_ref[...]

    # encoder: Linear + ReLU  (MXU matmul, f32 accumulation, f32 epilogue)
    h = jnp.dot(x, w_enc_ref[...], preferred_element_type=jnp.float32)
    h = jnp.maximum(h + b_enc_ref[...], 0.0)

    # decoder: Linear + Sigmoid
    y = jnp.dot(h.astype(w_dec_ref.dtype), w_dec_ref[...],
                preferred_element_type=jnp.float32)
    y = y + b_dec_ref[...]
    out_ref[...] = jax.nn.sigmoid(y).astype(out_ref.dtype)


def _plan_tiles(B, D_pad, H_pad, act_bytes, out_bytes, sub, max_tb):
    """Pick (tb, B_pad, vmem_limit, single_buffer_weights) — pure Python, trace-time."""
    hard_cap = (52 << 20) if _SMALL_VMEM else (100 << 20)
    single_buf = _SMALL_VMEM and _buffered1_supported()

    B_ceil = _round_up(max(B, 1), sub)
    if B_ceil <= 2 * sub:
        tb = B_ceil                                   # tiny batch: one tile
    else:
        # >= 2 grid steps so the "parallel" axis shards across v7x's 2 TCs.
        tb = min(max_tb, _round_up((B_ceil + 1) // 2, sub))
        if tb > 128:
            tb = max(128, (tb // 128) * 128)          # MXU-friendly M dimension

    def need(t):
        stream = 2 * t * D_pad * (act_bytes + out_bytes)        # double-buffered x / out
        wmult = 1 if single_buf else 2
        params = wmult * (2 * D_pad * H_pad * act_bytes + (H_pad + D_pad) * 4)
        temps = t * (H_pad + D_pad) * 4                         # f32 matmul results
        return stream + params + temps

    # Shrink tb before giving up resident weights (keeps the one-shot weight DMA).
    while need(tb) * 3 // 2 > hard_cap and tb > sub:
        tb = max(sub, _round_up(tb // 2, sub))
    # TODO(synk): add a K/N-tiled ("arbitrary" grid axis over D) path for configs
    # where the weights themselves no longer fit the per-core VMEM budget.

    B_pad = _round_up(B_ceil, tb)
    vmem_limit = int(min(hard_cap, max(need(tb) * 2, 8 << 20)))
    return tb, B_pad, vmem_limit, single_buf


def _build_pallas_call(B_pad, D_pad, H_pad, tb, out_dtype, vmem_limit, single_buf):
    # Grid-invariant params: single-buffered on v7x-class parts, default elsewhere
    # (constant index_map => fetched once either way; Buffered(1) just halves VMEM).
    const_kwargs = dict(pipeline_mode=pl.Buffered(1)) if single_buf else {}

    return pl.pallas_call(
        autoencoder_kernel,
        out_shape=jax.ShapeDtypeStruct((B_pad, D_pad), out_dtype),
        grid_spec=pltpu.PrefetchScalarGridSpec(
            num_scalar_prefetch=0,
            grid=(B_pad // tb,),
            in_specs=[
                pl.BlockSpec((tb, D_pad), lambda i: (i, 0)),                    # x tile
                pl.BlockSpec((D_pad, H_pad), lambda i: (0, 0), **const_kwargs),  # W_enc
                pl.BlockSpec((1, H_pad), lambda i: (0, 0), **const_kwargs),      # b_enc
                pl.BlockSpec((H_pad, D_pad), lambda i: (0, 0), **const_kwargs),  # W_dec
                pl.BlockSpec((1, D_pad), lambda i: (0, 0), **const_kwargs),      # b_dec
            ],
            out_specs=pl.BlockSpec((tb, D_pad), lambda i: (i, 0)),
        ),
        compiler_params=pltpu.CompilerParams(
            dimension_semantics=("parallel",),
            vmem_limit_bytes=vmem_limit,
        ),
    )


# ---------------------------------------------------------------------------
# Jitted forward (only x is processed per call; params are pre-padded/cast).
# ---------------------------------------------------------------------------
@functools.partial(jax.jit, static_argnums=(5, 6, 7))
def _autoencoder_fwd(x, w_enc_p, b_enc_p, w_dec_p, b_dec_p, d_out, out_dtype_name,
                     max_tb):
    B, _ = x.shape
    D_pad, H_pad = w_enc_p.shape
    cdt = w_enc_p.dtype
    odt = jnp.dtype(out_dtype_name) if out_dtype_name is not None else x.dtype

    sub = 16 if cdt == jnp.bfloat16 else 8            # sublane multiple of compute dtype
    tb, B_pad, vmem_limit, single_buf = _plan_tiles(
        B, D_pad, H_pad, jnp.dtype(cdt).itemsize, jnp.dtype(odt).itemsize, sub, max_tb)

    x_p = x
    if x_p.dtype != cdt:
        x_p = x_p.astype(cdt)
    if (B_pad, D_pad) != x_p.shape:
        x_p = jnp.pad(x_p, ((0, B_pad - x_p.shape[0]), (0, D_pad - x_p.shape[1])))

    call = _build_pallas_call(B_pad, D_pad, H_pad, tb, odt, vmem_limit, single_buf)
    out_p = call(x_p, w_enc_p, b_enc_p, w_dec_p, b_dec_p)
    return out_p[:B, :d_out]


def make_autoencoder_forward(w_enc, b_enc, w_dec, b_dec, *, use_bf16=True,
                             out_dtype=None, max_tb=512):
    """One-time init: pad+cast params to lane-dense (128-multiple) layout, return
    a jitted forward computing sigmoid(relu(x @ W_enc + b_enc) @ W_dec + b_dec)."""
    w_enc = jnp.asarray(w_enc)
    w_dec = jnp.asarray(w_dec)
    D, H = w_enc.shape
    assert w_dec.shape == (H, D)

    cdt = jnp.bfloat16 if use_bf16 else w_enc.dtype
    D_pad = _round_up(D, 128)
    H_pad = _round_up(H, 128)

    w_enc_p = jnp.pad(w_enc, ((0, D_pad - D), (0, H_pad - H))).astype(cdt)
    w_dec_p = jnp.pad(w_dec, ((0, H_pad - H), (0, D_pad - D))).astype(cdt)
    b_enc_p = jnp.pad(jnp.asarray(b_enc).reshape(1, H),
                      ((0, 0), (0, H_pad - H))).astype(jnp.float32)
    b_dec_p = jnp.pad(jnp.asarray(b_dec).reshape(1, D),
                      ((0, 0), (0, D_pad - D))).astype(jnp.float32)

    out_name = jnp.dtype(out_dtype).name if out_dtype is not None else None

    def forward(x):
        return _autoencoder_fwd(x, w_enc_p, b_enc_p, w_dec_p, b_dec_p,
                                D, out_name, max_tb)

    return forward


def reference_forward(x, w_enc, b_enc, w_dec, b_dec):
    h = jnp.maximum(x @ w_enc + b_enc.reshape(1, -1), 0.0)
    return jax.nn.sigmoid(h @ w_dec + b_dec.reshape(1, -1))


if __name__ == "__main__":
    key = jax.random.PRNGKey(0)
    k_x, k_we, k_be, k_wd, k_bd = jax.random.split(key, 5)

    B, D, H = 16, 64, 32  # batch, input features, latent features

    x = jax.random.normal(k_x, (B, D), dtype=jnp.float32)
    # Deterministic synthetic parameters (PyTorch nn.Linear-like fan-in scaling).
    w_enc = jax.random.normal(k_we, (D, H), dtype=jnp.float32) / jnp.sqrt(D)
    b_enc = jax.random.normal(k_be, (H,), dtype=jnp.float32) * 0.01
    w_dec = jax.random.normal(k_wd, (H, D), dtype=jnp.float32) / jnp.sqrt(H)
    b_dec = jax.random.normal(k_bd, (D,), dtype=jnp.float32) * 0.01

    ref = reference_forward(x, w_enc, b_enc, w_dec, b_dec)

    # f32 compute path: tight check against the pure-JAX reference.
    fwd_f32 = make_autoencoder_forward(w_enc, b_enc, w_dec, b_dec, use_bf16=False)
    out_f32 = jax.block_until_ready(fwd_f32(x))
    assert out_f32.shape == (B, D)
    assert jnp.allclose(out_f32, ref, atol=1e-4, rtol=1e-4), "f32 mismatch vs reference"

    # bf16 MXU operands (f32 accumulation/epilogue): tolerance set by input rounding.
    fwd_bf16 = make_autoencoder_forward(w_enc, b_enc, w_dec, b_dec, use_bf16=True)
    out_bf16 = jax.block_until_ready(fwd_bf16(x))
    assert out_bf16.shape == (B, D)
    assert jnp.allclose(out_bf16, ref, atol=2e-2, rtol=2e-2), "bf16 mismatch vs reference"

    print("KERNEL_OK")
</pallas_src>

<mosaic_0001>
module attributes {stable_mosaic.version = 11 : i64} {
  func.func @autoencoder_kernel(%arg0: i32, %arg1: memref<16x128xf32, #tpu.memory_space<vmem>>, %arg2: memref<128x128xf32, #tpu.memory_space<vmem>>, %arg3: memref<1x128xf32, #tpu.memory_space<vmem>>, %arg4: memref<128x128xf32, #tpu.memory_space<vmem>>, %arg5: memref<1x128xf32, #tpu.memory_space<vmem>>, %arg6: memref<16x128xf32, #tpu.memory_space<vmem>>) attributes {dimension_semantics = [#tpu.dimension_semantics<parallel>], iteration_bounds = array<i64: 1>, scalar_prefetch = 0 : i64, scratch_operands = 0 : i64, tpu.core_type = #tpu.core_type<tc>, window_params = [{transform_indices = @transform_0, window_bounds = array<i64: 16, 128>}, {pipeline_mode = #tpu.pipeline_mode<synchronous>, transform_indices = @transform_1, window_bounds = array<i64: 128, 128>}, {pipeline_mode = #tpu.pipeline_mode<synchronous>, transform_indices = @transform_2, window_bounds = array<i64: 1, 128>}, {pipeline_mode = #tpu.pipeline_mode<synchronous>, transform_indices = @transform_3, window_bounds = array<i64: 128, 128>}, {pipeline_mode = #tpu.pipeline_mode<synchronous>, transform_indices = @transform_4, window_bounds = array<i64: 1, 128>}, {transform_indices = @transform_5, window_bounds = array<i64: 16, 128>}]} {
    %c0 = arith.constant 0 : index
    %c0_0 = arith.constant 0 : index
    %0 = vector.load %arg1[%c0, %c0_0] : memref<16x128xf32, #tpu.memory_space<vmem>>, vector<16x128xf32>
    %c0_1 = arith.constant 0 : index
    %c0_2 = arith.constant 0 : index
    %1 = vector.load %arg2[%c0_1, %c0_2] : memref<128x128xf32, #tpu.memory_space<vmem>>, vector<128x128xf32>
    %cst = arith.constant dense<0.000000e+00> : vector<16x128xf32>
    %2 = tpu.matmul %0, %1, %cst {dimension_numbers = #tpu.dot_dimension_numbers<[1], [0], [0], [1], [0, 0, 1, 1], [], []>} : vector<16x128xf32>, vector<128x128xf32>, vector<16x128xf32> -> vector<16x128xf32>
    %c0_3 = arith.constant 0 : index
    %c0_4 = arith.constant 0 : index
    %3 = vector.load %arg3[%c0_3, %c0_4] : memref<1x128xf32, #tpu.memory_space<vmem>>, vector<1x128xf32>
    %4 = vector.broadcast %3 : vector<1x128xf32> to vector<16x128xf32>
    %5 = arith.addf %2, %4 : vector<16x128xf32>
    %cst_5 = arith.constant 0.000000e+00 : f32
    %6 = vector.broadcast %cst_5 : f32 to vector<16x128xf32>
    %7 = arith.maximumf %5, %6 : vector<16x128xf32>
    %c0_6 = arith.constant 0 : index
    %c0_7 = arith.constant 0 : index
    %8 = vector.load %arg4[%c0_6, %c0_7] : memref<128x128xf32, #tpu.memory_space<vmem>>, vector<128x128xf32>
    %cst_8 = arith.constant dense<0.000000e+00> : vector<16x128xf32>
    %9 = tpu.matmul %7, %8, %cst_8 {dimension_numbers = #tpu.dot_dimension_numbers<[1], [0], [0], [1], [0, 0, 1, 1], [], []>} : vector<16x128xf32>, vector<128x128xf32>, vector<16x128xf32> -> vector<16x128xf32>
    %c0_9 = arith.constant 0 : index
    %c0_10 = arith.constant 0 : index
    %10 = vector.load %arg5[%c0_9, %c0_10] : memref<1x128xf32, #tpu.memory_space<vmem>>, vector<1x128xf32>
    %11 = vector.broadcast %10 : vector<1x128xf32> to vector<16x128xf32>
    %12 = arith.addf %9, %11 : vector<16x128xf32>
    %13 = arith.negf %12 : vector<16x128xf32>
    %14 = math.exp %13 : vector<16x128xf32>
    %cst_11 = arith.constant 1.000000e+00 : f32
    %15 = vector.broadcast %cst_11 : f32 to vector<16x128xf32>
    %16 = arith.addf %15, %14 : vector<16x128xf32>
    %17 = arith.divf %15, %16 : vector<16x128xf32>
    %c0_12 = arith.constant 0 : index
    %c0_13 = arith.constant 0 : index
    %18 = vector.load %arg6[%c0_12, %c0_13] : memref<16x128xf32, #tpu.memory_space<vmem>>, vector<16x128xf32>
    tpu.vector_store %arg6[%c0_12, %c0_13], %17 {strides = array<i32>} : memref<16x128xf32, #tpu.memory_space<vmem>>, vector<16x128xf32>,
    return
  }
  func.func @transform_0(%arg0: i32) -> (i32, i32) {
    %c0_i32 = arith.constant 0 : i32
    %c0_i32_0 = arith.constant 0 : i32
    return %arg0, %c0_i32 : i32, i32
  }
  func.func @transform_1(%arg0: i32) -> (i32, i32) {
    %c0_i32 = arith.constant 0 : i32
    %c0_i32_0 = arith.constant 0 : i32
    %c0_i32_1 = arith.constant 0 : i32
    return %c0_i32, %c0_i32_0 : i32, i32
  }
  func.func @transform_2(%arg0: i32) -> (i32, i32) {
    %c0_i32 = arith.constant 0 : i32
    %c0_i32_0 = arith.constant 0 : i32
    %c0_i32_1 = arith.constant 0 : i32
    return %c0_i32, %c0_i32_0 : i32, i32
  }
  func.func @transform_3(%arg0: i32) -> (i32, i32) {
    %c0_i32 = arith.constant 0 : i32
    %c0_i32_0 = arith.constant 0 : i32
    %c0_i32_1 = arith.constant 0 : i32
    return %c0_i32, %c0_i32_0 : i32, i32
  }
  func.func @transform_4(%arg0: i32) -> (i32, i32) {
    %c0_i32 = arith.constant 0 : i32
    %c0_i32_0 = arith.constant 0 : i32
    %c0_i32_1 = arith.constant 0 : i32
    return %c0_i32, %c0_i32_0 : i32, i32
  }
  func.func @transform_5(%arg0: i32) -> (i32, i32) {
    %c0_i32 = arith.constant 0 : i32
    %c0_i32_0 = arith.constant 0 : i32
    return %arg0, %c0_i32 : i32, i32
  }
}

</mosaic_0001>

<llo_original>
// kernel: _autoencoder_fwd.1
$region0: #{_autoencoder_fwd.1}
  #allocation0 [shape = 'u32[]', space=smem, size = 0x4, offset = 0x4, fixed_abs, tag = 'smem constant byte address 0x4 - core index']
  #allocation1 [shape = 'u32[144,128]{1,0:T(1,128)}', space=vmem, size = 0x12000, scoped, tag = 'internal scratch']
  %s0 = inlined_call_operand.vmem [shape: f32[16,128], index: 0, kind: input, shape index: {}]
  %s1 = inlined_call_operand.hbm [shape: f32[128,128], index: 1, kind: input, shape index: {}]
  %s2 = inlined_call_operand.vmem [shape: f32[1,128], index: 2, kind: input, shape index: {}]
  %s3 = inlined_call_operand.hbm [shape: f32[128,128], index: 3, kind: input, shape index: {}]
  %s4 = inlined_call_operand.vmem [shape: f32[1,128], index: 4, kind: input, shape index: {}]
  %s5 = inlined_call_operand.hbm [shape: f32[16,128], index: 5, kind: output, shape index: {}]
  %s6 = sld [smem:[#allocation0]]
  $region38: #{_autoencoder_fwd.1} parent=0
    _
  %s8 = ssub.s32 1, %s6
  %s9 = scalar_select 0, %s8, %s6
  $region1: #{_autoencoder_fwd.1} parent=0
    #allocation2 [shape = 'u8[65536]{0}', space=vmem, size = 0x10000, scoped, tag = 'input window, operand 1, single buffered']
    #allocation3 [shape = 's32[1]{0}', space=sflag, size = 0x4, scoped, tag = 'scoped memory for _autoencoder_fwd.1']
    #allocation4 [shape = 's32[1]{0}', space=sflag, size = 0x4, scoped, tag = 'scoped memory for _autoencoder_fwd.1']
    #allocation5 [shape = 'u8[65536]{0}', space=vmem, size = 0x10000, scoped, tag = 'input window, operand 3, single buffered']
    #allocation6 [shape = 's32[1]{0}', space=sflag, size = 0x4, scoped, tag = 'scoped memory for _autoencoder_fwd.1']
    #allocation7 [shape = 'u8[8192]{0}', space=vmem, size = 0x2000, scoped, tag = 'output window, operand 0, single buffered']
    %10 = vsyncpa [#allocation3], 0
    %11 = vsyncpa [#allocation6], 0
    %12 = vsyncpa [#allocation4], 0
    // Predicated region
    $region2: #{_autoencoder_fwd.1} parent=1 // pred_check
      _
    $region3: #{_autoencoder_fwd.1} parent=1 // pred_check_branch
      %14 = sbr.rel (0) target = $region5
    $region4: #{_autoencoder_fwd.1} parent=1 // pred_region
      _
    $region5: #{_autoencoder_fwd.1} parent=1 // pred_fallthru
      _
    // Predicated region
    $region6: #{_autoencoder_fwd.1} parent=1 // pred_check
      _
    $region7: #{_autoencoder_fwd.1} parent=1 // pred_check_branch
      %16 = sbr.rel (0) target = $region9
    $region8: #{_autoencoder_fwd.1} parent=1 // pred_region
      %s18 = ssub.s32 2048, 2048
      %19 = vsyncadd [#allocation3], %s18
      %s20 = sshll.u32 [#allocation2], 4
      %s21 = int_to_ptr.vmem [resolvable:$true] %s20
      %26 = dma.hbm_to_vmem [thread:$0]  %s1, 2048, %s21, [#allocation3], 128, 128, 8
    $region9: #{_autoencoder_fwd.1} parent=1 // pred_fallthru
      _
    // Predicated region
    $region10: #{_autoencoder_fwd.1} parent=1 // pred_check
      _
    $region11: #{_autoencoder_fwd.1} parent=1 // pred_check_branch
      %28 = sbr.rel (0) target = $region13
    $region12: #{_autoencoder_fwd.1} parent=1 // pred_region
      _
    $region13: #{_autoencoder_fwd.1} parent=1 // pred_fallthru
      _
    // Predicated region
    $region14: #{_autoencoder_fwd.1} parent=1 // pred_check
      _
    $region15: #{_autoencoder_fwd.1} parent=1 // pred_check_branch
      %30 = sbr.rel (0) target = $region17
    $region16: #{_autoencoder_fwd.1} parent=1 // pred_region
      %s32 = ssub.s32 2048, 2048
      %33 = vsyncadd [#allocation6], %s32
      %s34 = sshll.u32 [#allocation5], 4
      %s35 = int_to_ptr.vmem [resolvable:$true] %s34
      %40 = dma.hbm_to_vmem [thread:$0]  %s3, 2048, %s35, [#allocation6], 128, 128, 8
    $region17: #{_autoencoder_fwd.1} parent=1 // pred_fallthru
      _
    // Predicated region
    $region18: #{_autoencoder_fwd.1} parent=1 // pred_check
      _
    $region19: #{_autoencoder_fwd.1} parent=1 // pred_check_branch
      %42 = sbr.rel (0) target = $region21
    $region20: #{_autoencoder_fwd.1} parent=1 // pred_region
      _
    $region21: #{_autoencoder_fwd.1} parent=1 // pred_fallthru
      _
    // Predicated region
    $region22: #{_autoencoder_fwd.1} parent=1 // pred_check
      _
    $region23: #{_autoencoder_fwd.1} parent=1 // pred_check_branch
      %44 = sbr.rel (0) target = $region25
    $region24: #{_autoencoder_fwd.1} parent=1 // pred_region
      %45 = dma.done [#allocation3], 2048
    $region25: #{_autoencoder_fwd.1} parent=1 // pred_fallthru
      _
    // Predicated region
    $region26: #{_autoencoder_fwd.1} parent=1 // pred_check
      _
    $region27: #{_autoencoder_fwd.1} parent=1 // pred_check_branch
      %47 = sbr.rel (0) target = $region29
    $region28: #{_autoencoder_fwd.1} parent=1 // pred_region
      %48 = dma.done [#allocation6], 2048
    $region29: #{_autoencoder_fwd.1} parent=1 // pred_fallthru
      _
    %v49 = vld [vmem:[%s0] sm:$0xff]
    %v50 = vld [vmem:[%s0 + $0x8] sm:$0xff]
    %v51 = vld [vmem:[#allocation2] sm:$0xff]
    %v52 = vld [vmem:[#allocation2 + $0x8] sm:$0xff]
    %v53 = vld [vmem:[#allocation2 + $0x10] sm:$0xff]
    %v54 = vld [vmem:[#allocation2 + $0x18] sm:$0xff]
    %v55 = vld [vmem:[#allocation2 + $0x20] sm:$0xff]
    %v56 = vld [vmem:[#allocation2 + $0x28] sm:$0xff]
    %v57 = vld [vmem:[#allocation2 + $0x30] sm:$0xff]
    %v58 = vld [vmem:[#allocation2 + $0x38] sm:$0xff]
    %v59 = vld [vmem:[#allocation2 + $0x40] sm:$0xff]
    %v60 = vld [vmem:[#allocation2 + $0x48] sm:$0xff]
    %v61 = vld [vmem:[#allocation2 + $0x50] sm:$0xff]
    %v62 = vld [vmem:[#allocation2 + $0x58] sm:$0xff]
    %v63 = vld [vmem:[#allocation2 + $0x60] sm:$0xff]
    %v64 = vld [vmem:[#allocation2 + $0x68] sm:$0xff]
    %v65 = vld [vmem:[#allocation2 + $0x70] sm:$0xff]
    %v66 = vld [vmem:[#allocation2 + $0x78] sm:$0xff]
    %v67 = vld [vmem:[%s2] sm:$0x1]
    %v69 = vlaneseq
    %v70 = vshrl.u32 %v69, 7
    %v71 = vsub.s32 0, %v70
    %v72 = vrot.slane %v67, %v71
    %74 = vmatprep.subr.mxu0 0.0
    %75 = vmatpush1.msra.mxu0 %v51
    %76 = vmatprep.subr.mxu0 0.0
    %77 = vmatpush1.msra.mxu0 %v52
    %78 = vmatprep.subr.mxu0 0.0
    %79 = vmatpush1.msra.mxu0 %v53
    %80 = vmatprep.subr.mxu0 0.0
    %81 = vmatpush1.msra.mxu0 %v54
    %82 = vmatprep.subr.mxu0 0.0
    %83 = vmatpush1.msra.mxu0 %v55
    %84 = vmatprep.subr.mxu0 0.0
    %85 = vmatpush1.msra.mxu0 %v56
    %86 = vmatprep.subr.mxu0 0.0
    %87 = vmatpush1.msra.mxu0 %v57
    %88 = vmatprep.subr.mxu0 0.0
    %89 = vmatpush1.msra.mxu0 %v58
    %90 = vmatprep.subr.mxu0 0.0
    %91 = vmatpush1.msra.mxu0 %v59
    %92 = vmatprep.subr.mxu0 0.0
    %93 = vmatpush1.msra.mxu0 %v60
    %94 = vmatprep.subr.mxu0 0.0
    %95 = vmatpush1.msra.mxu0 %v61
    %96 = vmatprep.subr.mxu0 0.0
    %97 = vmatpush1.msra.mxu0 %v62
    %98 = vmatprep.subr.mxu0 0.0
    %99 = vmatpush1.msra.mxu0 %v63
    %100 = vmatprep.subr.mxu0 0.0
    %101 = vmatpush1.msra.mxu0 %v64
    %102 = vmatprep.subr.mxu0 0.0
    %103 = vmatpush1.msra.mxu0 %v65
    %104 = vmatprep.subr.mxu0 0.0
    %105 = vmatpush1.msra.mxu0 %v66
    %106 = vmatprep.subr.mxu0 0.0
    %107 = vmatpush1.msra.mxu0 0.0
    %108 = vmatprep.subr.mxu0 0.0
    %109 = vmatpush1.msra.mxu0 0.0
    %110 = vmatprep.subr.mxu0 0.0
    %111 = vmatpush1.msra.mxu0 0.0
    %112 = vmatprep.subr.mxu0 0.0
    %113 = vmatpush1.msra.mxu0 0.0
    %114 = vmatprep.subr.mxu0 0.0
    %115 = vmatpush1.msra.mxu0 0.0
    %116 = vmatprep.subr.mxu0 0.0
    %117 = vmatpush1.msra.mxu0 0.0
    %118 = vmatprep.subr.mxu0 0.0
    %119 = vmatpush1.msra.mxu0 0.0
    %120 = vmatprep.subr.mxu0 0.0
    %121 = vmatpush1.msra.mxu0 0.0
    %122 = vmatprep.subr.mxu0 0.0
    %123 = vmatpush1.msra.mxu0 0.0
    %124 = vmatprep.subr.mxu0 0.0
    %125 = vmatpush1.msra.mxu0 0.0
    %126 = vmatprep.subr.mxu0 0.0
    %127 = vmatpush1.msra.mxu0 0.0
    %128 = vmatprep.subr.mxu0 0.0
    %129 = vmatpush1.msra.mxu0 0.0
    %130 = vmatprep.subr.mxu0 0.0
    %131 = vmatpush1.msra.mxu0 0.0
    %132 = vmatprep.subr.mxu0 0.0
    %133 = vmatpush1.msra.mxu0 0.0
    %134 = vmatprep.subr.mxu0 0.0
    %135 = vmatpush1.msra.mxu0 0.0
    %136 = vmatprep.subr.mxu0 0.0
    %137 = vmatpush1.msra.mxu0 0.0
    %138 = vmatprep.mubr.f32.mxu0 0.0
    %139 = vmatmul.mubr.f32.gmra.mrb[0].mxu0 %v49
    %v140 = vpop.f32.mrb[0].mxu0
    %v141 = vadd.f32 %v72, %v140
    %v142 = vpop.f32.mrb[0].mxu0
    %143 = vmatprep.mubr.f32.mxu0 0.0
    %144 = vmatmul.mubr.f32.gmra.mrb[0].mxu0 %v50
    %v145 = vpop.f32.mrb[0].mxu0
    %v146 = vadd.f32 %v72, %v145
    %v147 = vpop.f32.mrb[0].mxu0
    %148 = vdwg.mxu0
    %v149 = vmax.f32 %v141, 0.0
    %v150 = vmax.f32 %v146, 0.0
    %v151 = vld [vmem:[#allocation5] sm:$0xff]
    %v152 = vld [vmem:[#allocation5 + $0x8] sm:$0xff]
    %v153 = vld [vmem:[#allocation5 + $0x10] sm:$0xff]
    %v154 = vld [vmem:[#allocation5 + $0x18] sm:$0xff]
    %v155 = vld [vmem:[#allocation5 + $0x20] sm:$0xff]
    %v156 = vld [vmem:[#allocation5 + $0x28] sm:$0xff]
    %v157 = vld [vmem:[#allocation5 + $0x30] sm:$0xff]
    %v158 = vld [vmem:[#allocation5 + $0x38] sm:$0xff]
    %v159 = vld [vmem:[#allocation5 + $0x40] sm:$0xff]
    %v160 = vld [vmem:[#allocation5 + $0x48] sm:$0xff]
    %v161 = vld [vmem:[#allocation5 + $0x50] sm:$0xff]
    %v162 = vld [vmem:[#allocation5 + $0x58] sm:$0xff]
    %v163 = vld [vmem:[#allocation5 + $0x60] sm:$0xff]
    %v164 = vld [vmem:[#allocation5 + $0x68] sm:$0xff]
    %v165 = vld [vmem:[#allocation5 + $0x70] sm:$0xff]
    %v166 = vld [vmem:[#allocation5 + $0x78] sm:$0xff]
    %v167 = vld [vmem:[%s4] sm:$0x1]
    %v169 = vlaneseq
    %v170 = vshrl.u32 %v169, 7
    %v171 = vsub.s32 0, %v170
    %v172 = vrot.slane %v167, %v171
    %174 = vmatprep.subr.mxu0 0.0
    %175 = vmatpush1.msra.mxu0 %v151
    %176 = vmatprep.subr.mxu0 0.0
    %177 = vmatpush1.msra.mxu0 %v152
    %178 = vmatprep.subr.mxu0 0.0
    %179 = vmatpush1.msra.mxu0 %v153
    %180 = vmatprep.subr.mxu0 0.0
    %181 = vmatpush1.msra.mxu0 %v154
    %182 = vmatprep.subr.mxu0 0.0
    %183 = vmatpush1.msra.mxu0 %v155
    %184 = vmatprep.subr.mxu0 0.0
    %185 = vmatpush1.msra.mxu0 %v156
    %186 = vmatprep.subr.mxu0 0.0
    %187 = vmatpush1.msra.mxu0 %v157
    %188 = vmatprep.subr.mxu0 0.0
    %189 = vmatpush1.msra.mxu0 %v158
    %190 = vmatprep.subr.mxu0 0.0
    %191 = vmatpush1.msra.mxu0 %v159
    %192 = vmatprep.subr.mxu0 0.0
    %193 = vmatpush1.msra.mxu0 %v160
    %194 = vmatprep.subr.mxu0 0.0
    %195 = vmatpush1.msra.mxu0 %v161
    %196 = vmatprep.subr.mxu0 0.0
    %197 = vmatpush1.msra.mxu0 %v162
    %198 = vmatprep.subr.mxu0 0.0
    %199 = vmatpush1.msra.mxu0 %v163
    %200 = vmatprep.subr.mxu0 0.0
    %201 = vmatpush1.msra.mxu0 %v164
    %202 = vmatprep.subr.mxu0 0.0
    %203 = vmatpush1.msra.mxu0 %v165
    %204 = vmatprep.subr.mxu0 0.0
    %205 = vmatpush1.msra.mxu0 %v166
    %206 = vmatprep.subr.mxu0 0.0
    %207 = vmatpush1.msra.mxu0 0.0
    %208 = vmatprep.subr.mxu0 0.0
    %209 = vmatpush1.msra.mxu0 0.0
    %210 = vmatprep.subr.mxu0 0.0
    %211 = vmatpush1.msra.mxu0 0.0
    %212 = vmatprep.subr.mxu0 0.0
    %213 = vmatpush1.msra.mxu0 0.0
    %214 = vmatprep.subr.mxu0 0.0
    %215 = vmatpush1.msra.mxu0 0.0
    %216 = vmatprep.subr.mxu0 0.0
    %217 = vmatpush1.msra.mxu0 0.0
    %218 = vmatprep.subr.mxu0 0.0
    %219 = vmatpush1.msra.mxu0 0.0
    %220 = vmatprep.subr.mxu0 0.0
    %221 = vmatpush1.msra.mxu0 0.0
    %222 = vmatprep.subr.mxu0 0.0
    %223 = vmatpush1.msra.mxu0 0.0
    %224 = vmatprep.subr.mxu0 0.0
    %225 = vmatpush1.msra.mxu0 0.0
    %226 = vmatprep.subr.mxu0 0.0
    %227 = vmatpush1.msra.mxu0 0.0
    %228 = vmatprep.subr.mxu0 0.0
    %229 = vmatpush1.msra.mxu0 0.0
    %230 = vmatprep.subr.mxu0 0.0
    %231 = vmatpush1.msra.mxu0 0.0
    %232 = vmatprep.subr.mxu0 0.0
    %233 = vmatpush1.msra.mxu0 0.0
    %234 = vmatprep.subr.mxu0 0.0
    %235 = vmatpush1.msra.mxu0 0.0
    %236 = vmatprep.subr.mxu0 0.0
    %237 = vmatpush1.msra.mxu0 0.0
    %238 = vmatprep.mubr.f32.mxu0 0.0
    %239 = vmatmul.mubr.f32.gmra.mrb[0].mxu0 %v149
    %v240 = vpop.f32.mrb[0].mxu0
    %v241 = vadd.f32 %v172, %v240
    %v242 = vpop.f32.mrb[0].mxu0
    %243 = vmatprep.mubr.f32.mxu0 0.0
    %244 = vmatmul.mubr.f32.gmra.mrb[0].mxu0 %v150
    %v245 = vpop.f32.mrb[0].mxu0
    %v246 = vadd.f32 %v172, %v245
    %v247 = vpop.f32.mrb[0].mxu0
    %248 = vdwg.mxu0
    %v249 = vxor.u32 %v241, 2147483648
    %v250 = vxor.u32 %v246, 2147483648
    %v251 = vmul.f32 %v249, 1.442695
    %v252 = vpow.pop %v251
    %v253 = vmul.f32 %v250, 1.442695
    %v254 = vpow.pop %v253
    %v255 = vadd.f32 %v252, 1.0
    %v256 = vadd.f32 %v254, 1.0
    %v257 = vrcp.pop %v255
    %v258 = vmul.f32 1.0, %v257
    %v259 = vrcp.pop %v256
    %v260 = vmul.f32 1.0, %v259
    %261 = vst [vmem:[#allocation7] sm:$0xff] %v258
    %262 = vst [vmem:[#allocation7 + $0x8] sm:$0xff] %v260
    // Predicated region
    $region30: #{_autoencoder_fwd.1} parent=1 // pred_check
      _
    $region31: #{_autoencoder_fwd.1} parent=1 // pred_check_branch
      %264 = sbr.rel (0) target = $region33
    $region32: #{_autoencoder_fwd.1} parent=1 // pred_region
      %s266 = ssub.s32 256, 256
      %267 = vsyncadd [#allocation4], %s266
      %s268 = sshll.u32 [#allocation7], 4
      %s269 = int_to_ptr.vmem [resolvable:$true] %s268
      %274 = dma.vmem_to_hbm [thread:$0]  %s269, 256, %s5, [#allocation4], 128, 128, 8
    $region33: #{_autoencoder_fwd.1} parent=1 // pred_fallthru
      _
    // Predicated region
    $region34: #{_autoencoder_fwd.1} parent=1 // pred_check
      _
    $region35: #{_autoencoder_fwd.1} parent=1 // pred_check_branch
      %276 = sbr.rel (0) target = $region37
    $region36: #{_autoencoder_fwd.1} parent=1 // pred_region
      %277 = dma.done [#allocation4], 256
    $region37: #{_autoencoder_fwd.1} parent=1 // pred_fallthru
      _
    %278 = vsyncpa [#allocation3], 1
    %279 = vsyncpa [#allocation6], 1
    %280 = vsyncpa [#allocation4], 1

</llo_original>
